<compile_context>
chip_gen: v5e
topology: v5e:2x2
jax: 0.10.0
libtpu: 0.0.40
codegen_flags: <defaults>
</compile_context>

<pallas_src>
import numpy as np
import jax
import jax.numpy as jnp
from jax.experimental import pallas as pl
from jax.experimental.pallas import tpu as pltpu

# ------------------------- model hyper-parameters ----------------------------
DIM_EMB = 32          # dim_feature_embedding
N_STATIC = 4          # time-invariant features  (len(time_code[0]))
N_TS_FEATURES = 6     # features per time step   (len(time_code[1]))
N_TIMES = 3           # number of time steps     (len(time_code) - 1)
BATCH = 4


def build_time_code(n_static, n_ts, n_times):
    """FIDDLE-style layout: static columns first, then contiguous per-time-step blocks."""
    tc = [list(range(n_static))]
    for t in range(n_times):
        start = n_static + t * n_ts
        tc.append(list(range(start, start + n_ts)))
    return tc


TIME_CODE = build_time_code(N_STATIC, N_TS_FEATURES, N_TIMES)
TOTAL_FEATURES = len(TIME_CODE[0]) + len(TIME_CODE[1])             # distinct embeddings
TIME_SERIES_START = TIME_CODE[1][0]
N_TOKENS = len(TIME_CODE[0]) + sum(len(s) for s in TIME_CODE[1:])
N_COLS = max(c for s in TIME_CODE for c in s) + 1                  # columns of x


def build_token_index_maps(time_code):
    """Static per-token index maps, resolved at trace time (mirrors the torch forward)."""
    total_features = len(time_code[0]) + len(time_code[1])
    ts_start = time_code[1][0]
    n_times = len(time_code) - 1
    cols, emb_idx, time_idx = [], [], []
    for t in time_code[0]:                        # static tokens
        cols.append(t)
        emb_idx.append(t)
        time_idx.append(0)
    for step, subset in enumerate(time_code[1:], start=1):
        for i, t in enumerate(subset):            # time-series tokens: Linear shared per slot
            cols.append(t)
            emb_idx.append(time_code[1][i])
            time_idx.append(step)
    # feature_index_embedding rows: [0:ts_start] then rows[ts_start:] tiled n_times
    feat_idx = list(range(ts_start)) + list(range(ts_start, total_features)) * n_times
    return (np.asarray(cols, np.int32), np.asarray(emb_idx, np.int32),
            np.asarray(feat_idx, np.int32), np.asarray(time_idx, np.int32))


TOKEN_MAPS = build_token_index_maps(TIME_CODE)

# ------------------------------ Pallas kernel --------------------------------
_VMEM = pl.BlockSpec(memory_space=pltpu.MemorySpace.VMEM)


def embed_kernel(xg_ref, w_ref, b_ref, fe_ref, te_ref, o_ref):
    """Fused per-token Linear(1, D) + feature-index + time-index embedding adds.

    xg_ref : (B, n_tok, 1)   gathered scalar input per (batch, token)
    w_ref  : (n_tok, D)      per-token Linear(1, D) weight row
    b_ref, fe_ref, te_ref : (n_tok, D) per-token bias / feature-index / time-index rows
    o_ref  : (B, n_tok, D)
    """
    xg = xg_ref[...]                                   # (B, n_tok, 1)
    w = w_ref[...]                                     # (n_tok, D)
    add = b_ref[...] + fe_ref[...] + te_ref[...]       # hoisted once: (n_tok, D)
    out = xg * w[None, :, :] + add[None, :, :]         # broadcast over batch & lanes
    o_ref[...] = out.astype(o_ref.dtype)


@jax.jit
def binary_embedding_forward(x, params):
    """x: (B, n_cols) float32 -> (B, n_tokens, DIM_EMB) float32."""
    cols, emb_idx, feat_idx, time_idx = TOKEN_MAPS
    # Static-index gathers = parameter / column plumbing (data independent, fused by XLA);
    # the single Pallas kernel below does all per-element arithmetic in VMEM.
    x_g = jnp.take(x, cols, axis=1)[:, :, None]                # (B, n_tok, 1)
    w_tok = jnp.take(params['w_in'], emb_idx, axis=0)          # (n_tok, D)
    b_tok = jnp.take(params['b_in'], emb_idx, axis=0)          # (n_tok, D)
    fe_tok = jnp.take(params['feat_emb'], feat_idx, axis=0)    # (n_tok, D)
    te_tok = jnp.take(params['time_emb'], time_idx, axis=0)    # (n_tok, D)

    b_sz, n_tok = x_g.shape[0], x_g.shape[1]
    d = w_tok.shape[1]
    return pl.pallas_call(
        embed_kernel,
        out_shape=jax.ShapeDtypeStruct((b_sz, n_tok, d), jnp.float32),
        in_specs=[_VMEM] * 5,
        out_specs=_VMEM,
    )(x_g, w_tok, b_tok, fe_tok, te_tok)


# ------------------------- pure-JAX reference ---------------------------------
def binary_embedding_ref(x, params, time_code):
    """Direct transcription of the torch forward()."""
    w_in, b_in = params['w_in'], params['b_in']
    X = []
    for t in time_code[0]:
        X.append(x[:, t:t + 1] * w_in[t][None, :] + b_in[t][None, :])
    for subset in time_code[1:]:
        for i, t in enumerate(subset):
            j = time_code[1][i]
            X.append(x[:, t:t + 1] * w_in[j][None, :] + b_in[j][None, :])
    X = jnp.stack(X, axis=1)                                    # (B, n_tok, D)

    s = time_code[1][0]
    n_times = len(time_code) - 1
    fe = params['feat_emb']
    fe_full = jnp.concatenate([fe[:s], jnp.tile(fe[s:], (n_times, 1))], axis=0)
    X = X + fe_full[None, :, :]

    te = params['time_emb']
    te_full = jnp.concatenate(
        [jnp.repeat(te[i:i + 1], len(subset), axis=0)
         for i, subset in enumerate(time_code)], axis=0)
    X = X + te_full[None, :, :]
    return X


# --------------------------------- main ---------------------------------------
if __name__ == "__main__":
    key = jax.random.PRNGKey(0)
    k_x, k_w, k_b, k_fe, k_te = jax.random.split(key, 5)

    x = jax.random.normal(k_x, (BATCH, N_COLS), jnp.float32)

    bound = 1.0  # torch nn.Linear(1, D) default init bound = 1/sqrt(in_features) = 1
    params = {
        # stacked nn.ModuleList([nn.Linear(1, D)] * (total_features + 1))
        'w_in': jax.random.uniform(k_w, (TOTAL_FEATURES + 1, DIM_EMB), jnp.float32, -bound, bound),
        'b_in': jax.random.uniform(k_b, (TOTAL_FEATURES + 1, DIM_EMB), jnp.float32, -bound, bound),
        # nn.Embedding(total_features, D), nn.Embedding(len(time_code), D)  (N(0,1) init)
        'feat_emb': jax.random.normal(k_fe, (TOTAL_FEATURES, DIM_EMB), jnp.float32),
        'time_emb': jax.random.normal(k_te, (len(TIME_CODE), DIM_EMB), jnp.float32),
    }

    out = binary_embedding_forward(x, params)
    out = jax.block_until_ready(out)

    ref = binary_embedding_ref(x, params, TIME_CODE)
    assert out.shape == (BATCH, N_TOKENS, DIM_EMB), out.shape
    assert bool(jnp.allclose(out, ref, atol=1e-5, rtol=1e-5)), "mismatch vs. JAX reference"

    print("KERNEL_OK")
</pallas_src>

<mosaic_0001>
module attributes {stable_mosaic.version = 11 : i64} {
  func.func @embed_kernel(%arg0: memref<4x22x1xf32, #tpu.memory_space<vmem>>, %arg1: memref<22x32xf32, #tpu.memory_space<vmem>>, %arg2: memref<22x32xf32, #tpu.memory_space<vmem>>, %arg3: memref<22x32xf32, #tpu.memory_space<vmem>>, %arg4: memref<22x32xf32, #tpu.memory_space<vmem>>, %arg5: memref<4x22x32xf32, #tpu.memory_space<vmem>>) attributes {dimension_semantics = [], scalar_prefetch = 0 : i64, scratch_operands = 0 : i64, tpu.core_type = #tpu.core_type<tc>} {
    %c0 = arith.constant 0 : index
    %c0_0 = arith.constant 0 : index
    %c0_1 = arith.constant 0 : index
    %0 = vector.load %arg0[%c0, %c0_0, %c0_1] : memref<4x22x1xf32, #tpu.memory_space<vmem>>, vector<4x22x1xf32>
    %c0_2 = arith.constant 0 : index
    %c0_3 = arith.constant 0 : index
    %1 = vector.load %arg1[%c0_2, %c0_3] : memref<22x32xf32, #tpu.memory_space<vmem>>, vector<22x32xf32>
    %c0_4 = arith.constant 0 : index
    %c0_5 = arith.constant 0 : index
    %2 = vector.load %arg2[%c0_4, %c0_5] : memref<22x32xf32, #tpu.memory_space<vmem>>, vector<22x32xf32>
    %c0_6 = arith.constant 0 : index
    %c0_7 = arith.constant 0 : index
    %3 = vector.load %arg3[%c0_6, %c0_7] : memref<22x32xf32, #tpu.memory_space<vmem>>, vector<22x32xf32>
    %4 = arith.addf %2, %3 : vector<22x32xf32>
    %c0_8 = arith.constant 0 : index
    %c0_9 = arith.constant 0 : index
    %5 = vector.load %arg4[%c0_8, %c0_9] : memref<22x32xf32, #tpu.memory_space<vmem>>, vector<22x32xf32>
    %6 = arith.addf %4, %5 : vector<22x32xf32>
    %7 = vector.shape_cast %1 : vector<22x32xf32> to vector<1x22x32xf32>
    %8 = vector.broadcast %0 : vector<4x22x1xf32> to vector<4x22x32xf32>
    %9 = vector.broadcast %7 : vector<1x22x32xf32> to vector<4x22x32xf32>
    %10 = arith.mulf %8, %9 : vector<4x22x32xf32>
    %11 = vector.shape_cast %6 : vector<22x32xf32> to vector<1x22x32xf32>
    %12 = vector.broadcast %11 : vector<1x22x32xf32> to vector<4x22x32xf32>
    %13 = arith.addf %10, %12 : vector<4x22x32xf32>
    %c0_10 = arith.constant 0 : index
    %c0_11 = arith.constant 0 : index
    %c0_12 = arith.constant 0 : index
    %14 = vector.load %arg5[%c0_10, %c0_11, %c0_12] : memref<4x22x32xf32, #tpu.memory_space<vmem>>, vector<4x22x32xf32>
    tpu.vector_store %arg5[%c0_10, %c0_11, %c0_12], %13 {strides = array<i32>} : memref<4x22x32xf32, #tpu.memory_space<vmem>>, vector<4x22x32xf32>,
    return
  }
}

</mosaic_0001>

<llo_original>
// kernel: binary_embedding_forward.1
$region0: #{binary_embedding_forward.1}
  #allocation0 [shape = 'u32[]', space=smem, size = 0x4, offset = 0x4, fixed_abs, tag = 'smem constant byte address 0x4 - core index']
  #allocation1 [shape = 'u32[72,128]{1,0:T(1,128)}', space=vmem, size = 0x9000, scoped, tag = 'internal scratch']
  %s0 = inlined_call_operand.vmem [shape: f32[4,22,1], index: 0, kind: input, shape index: {}]
  %s1 = inlined_call_operand.vmem [shape: f32[22,32], index: 1, kind: input, shape index: {}]
  %s2 = inlined_call_operand.vmem [shape: f32[22,32], index: 2, kind: input, shape index: {}]
  %s3 = inlined_call_operand.vmem [shape: f32[22,32], index: 3, kind: input, shape index: {}]
  %s4 = inlined_call_operand.vmem [shape: f32[22,32], index: 4, kind: input, shape index: {}]
  %s5 = inlined_call_operand.vmem [shape: f32[4,22,32], index: 5, kind: output, shape index: {}]
  %s6 = sld [smem:[#allocation0]]
  $region30: #{binary_embedding_forward.1} parent=0
    _
  %s8 = ssub.s32 1, %s6
  %s9 = scalar_select 0, %s8, %s6
  // Predicated region
  $region2: #{binary_embedding_forward.1} parent=0 // pred_check
    _
  $region3: #{binary_embedding_forward.1} parent=0 // pred_check_branch
    %11 = sbr.rel (0) target = $region5
  $region4: #{binary_embedding_forward.1} parent=0 // pred_region
    _
  $region5: #{binary_embedding_forward.1} parent=0 // pred_fallthru
    _
  // Predicated region
  $region6: #{binary_embedding_forward.1} parent=0 // pred_check
    _
  $region7: #{binary_embedding_forward.1} parent=0 // pred_check_branch
    %13 = sbr.rel (0) target = $region9
  $region8: #{binary_embedding_forward.1} parent=0 // pred_region
    _
  $region9: #{binary_embedding_forward.1} parent=0 // pred_fallthru
    _
  // Predicated region
  $region10: #{binary_embedding_forward.1} parent=0 // pred_check
    _
  $region11: #{binary_embedding_forward.1} parent=0 // pred_check_branch
    %15 = sbr.rel (0) target = $region13
  $region12: #{binary_embedding_forward.1} parent=0 // pred_region
    _
  $region13: #{binary_embedding_forward.1} parent=0 // pred_fallthru
    _
  // Predicated region
  $region14: #{binary_embedding_forward.1} parent=0 // pred_check
    _
  $region15: #{binary_embedding_forward.1} parent=0 // pred_check_branch
    %17 = sbr.rel (0) target = $region17
  $region16: #{binary_embedding_forward.1} parent=0 // pred_region
    _
  $region17: #{binary_embedding_forward.1} parent=0 // pred_fallthru
    _
  // Predicated region
  $region18: #{binary_embedding_forward.1} parent=0 // pred_check
    _
  $region19: #{binary_embedding_forward.1} parent=0 // pred_check_branch
    %19 = sbr.rel (0) target = $region21
  $region20: #{binary_embedding_forward.1} parent=0 // pred_region
    _
  $region21: #{binary_embedding_forward.1} parent=0 // pred_fallthru
    _
  %v20 = vld [vmem:[%s0] sm:$0xff]
  %v21 = vld [vmem:[%s0 + $0x8] sm:$0xff]
  %v22 = vld [vmem:[%s0 + $0x10] sm:$0x3f]
  %v23 = vld [vmem:[%s0 + $0x18] sm:$0xff]
  %v24 = vld [vmem:[%s0 + $0x20] sm:$0xff]
  %v25 = vld [vmem:[%s0 + $0x28] sm:$0x3f]
  %v26 = vld [vmem:[%s0 + $0x30] sm:$0xff]
  %v27 = vld [vmem:[%s0 + $0x38] sm:$0xff]
  %v28 = vld [vmem:[%s0 + $0x40] sm:$0x3f]
  %v29 = vld [vmem:[%s0 + $0x48] sm:$0xff]
  %v30 = vld [vmem:[%s0 + $0x50] sm:$0xff]
  %v31 = vld [vmem:[%s0 + $0x58] sm:$0x3f]
  %v32 = vld [vmem:[%s1] sm:$0xff]
  %v33 = vld [vmem:[%s1 + $0x8] sm:$0xff]
  %v34 = vld [vmem:[%s1 + $0x10] sm:$0x3f]
  %v35 = vld [vmem:[%s2] sm:$0xff]
  %v36 = vld [vmem:[%s2 + $0x8] sm:$0xff]
  %v37 = vld [vmem:[%s2 + $0x10] sm:$0x3f]
  %v38 = vld [vmem:[%s3] sm:$0xff]
  %v39 = vld [vmem:[%s3 + $0x8] sm:$0xff]
  %v40 = vld [vmem:[%s3 + $0x10] sm:$0x3f]
  %v41 = vadd.f32 %v35, %v38
  %v42 = vadd.f32 %v36, %v39
  %v43 = vadd.f32 %v37, %v40
  %v44 = vld [vmem:[%s4] sm:$0xff]
  %v45 = vld [vmem:[%s4 + $0x8] sm:$0xff]
  %v46 = vld [vmem:[%s4 + $0x10] sm:$0x3f]
  %v47 = vadd.f32 %v41, %v44
  %v48 = vadd.f32 %v42, %v45
  %v49 = vadd.f32 %v43, %v46
  %51 = vset.pattern.permute.xlu0 0
  %52 = vperm.xlu0 %51, %v20
  %v53 = vpop.permute.xlu0 %52
  %56 = vset.pattern.permute.xlu0 0
  %57 = vperm.xlu0 %56, %v21
  %v58 = vpop.permute.xlu0 %57
  %61 = vset.pattern.permute.xlu0 0
  %62 = vperm.xlu0 %61, %v22
  %v63 = vpop.permute.xlu0 %62
  %66 = vset.pattern.permute.xlu0 0
  %67 = vperm.xlu0 %66, %v23
  %v68 = vpop.permute.xlu0 %67
  %71 = vset.pattern.permute.xlu0 0
  %72 = vperm.xlu0 %71, %v24
  %v73 = vpop.permute.xlu0 %72
  %76 = vset.pattern.permute.xlu0 0
  %77 = vperm.xlu0 %76, %v25
  %v78 = vpop.permute.xlu0 %77
  %81 = vset.pattern.permute.xlu0 0
  %82 = vperm.xlu0 %81, %v26
  %v83 = vpop.permute.xlu0 %82
  %86 = vset.pattern.permute.xlu0 0
  %87 = vperm.xlu0 %86, %v27
  %v88 = vpop.permute.xlu0 %87
  %91 = vset.pattern.permute.xlu0 0
  %92 = vperm.xlu0 %91, %v28
  %v93 = vpop.permute.xlu0 %92
  %96 = vset.pattern.permute.xlu0 0
  %97 = vperm.xlu0 %96, %v29
  %v98 = vpop.permute.xlu0 %97
  %101 = vset.pattern.permute.xlu0 0
  %102 = vperm.xlu0 %101, %v30
  %v103 = vpop.permute.xlu0 %102
  %106 = vset.pattern.permute.xlu0 0
  %107 = vperm.xlu0 %106, %v31
  %v108 = vpop.permute.xlu0 %107
  %v110 = vmul.f32 %v53, %v32
  %v111 = vmul.f32 %v58, %v33
  %v112 = vmul.f32 %v63, %v34
  %v113 = vmul.f32 %v68, %v32
  %v114 = vmul.f32 %v73, %v33
  %v115 = vmul.f32 %v78, %v34
  %v116 = vmul.f32 %v83, %v32
  %v117 = vmul.f32 %v88, %v33
  %v118 = vmul.f32 %v93, %v34
  %v119 = vmul.f32 %v98, %v32
  %v120 = vmul.f32 %v103, %v33
  %v121 = vmul.f32 %v108, %v34
  %v122 = vadd.f32 %v110, %v47
  %v123 = vadd.f32 %v111, %v48
  %v124 = vadd.f32 %v112, %v49
  %v125 = vadd.f32 %v113, %v47
  %v126 = vadd.f32 %v114, %v48
  %v127 = vadd.f32 %v115, %v49
  %v128 = vadd.f32 %v116, %v47
  %v129 = vadd.f32 %v117, %v48
  %v130 = vadd.f32 %v118, %v49
  %v131 = vadd.f32 %v119, %v47
  %v132 = vadd.f32 %v120, %v48
  %v133 = vadd.f32 %v121, %v49
  %vm134 = vcmask 261120
  %135 = vst.msk [vmem:[%s5] sm:$0xff] %vm134, %v122
  %136 = vst.msk [vmem:[%s5 + $0x8] sm:$0xff] %vm134, %v123
  %vm137 = vcmask 259072
  %138 = vst.msk [vmem:[%s5 + $0x10] sm:$0x3f] %vm137, %v124
  %139 = vst.msk [vmem:[%s5 + $0x18] sm:$0xff] %vm134, %v125
  %140 = vst.msk [vmem:[%s5 + $0x20] sm:$0xff] %vm134, %v126
  %141 = vst.msk [vmem:[%s5 + $0x28] sm:$0x3f] %vm137, %v127
  %142 = vst.msk [vmem:[%s5 + $0x30] sm:$0xff] %vm134, %v128
  %143 = vst.msk [vmem:[%s5 + $0x38] sm:$0xff] %vm134, %v129
  %144 = vst.msk [vmem:[%s5 + $0x40] sm:$0x3f] %vm137, %v130
  %145 = vst.msk [vmem:[%s5 + $0x48] sm:$0xff] %vm134, %v131
  %146 = vst.msk [vmem:[%s5 + $0x50] sm:$0xff] %vm134, %v132
  %147 = vst.msk [vmem:[%s5 + $0x58] sm:$0x3f] %vm137, %v133
  // Predicated region
  $region22: #{binary_embedding_forward.1} parent=0 // pred_check
    _
  $region23: #{binary_embedding_forward.1} parent=0 // pred_check_branch
    %149 = sbr.rel (0) target = $region25
  $region24: #{binary_embedding_forward.1} parent=0 // pred_region
    _
  $region25: #{binary_embedding_forward.1} parent=0 // pred_fallthru
    _
  // Predicated region
  $region26: #{binary_embedding_forward.1} parent=0 // pred_check
    _
  $region27: #{binary_embedding_forward.1} parent=0 // pred_check_branch
    %151 = sbr.rel (0) target = $region29
  $region28: #{binary_embedding_forward.1} parent=0 // pred_region
    _
  $region29: #{binary_embedding_forward.1} parent=0 // pred_fallthru
    _

</llo_original>
